<compile_context>
chip_gen: v7x
topology: tpu7x:2x2x1
jax: 0.10.0
libtpu: 0.0.40
codegen_flags: <defaults>
</compile_context>

<pallas_src>
import jax
import jax.numpy as jnp
from jax.experimental import pallas as pl
from jax.experimental.pallas import tpu as pltpu


def _round_up(v: int, m: int) -> int:
    return ((v + m - 1) // m) * m


def _linear_kernel(x_ref, wt_ref, o_ref):
    """out[i, j] (+)= x[i-block, k-block] @ W.T[k-block, j-block].

    The output BlockSpec ignores the k axis, so the (tm, tn) f32 output tile is
    resident in VMEM across the whole K reduction — we accumulate directly into
    it and need no scratch accumulator or final copy/cast.
    """
    @pl.when(pl.program_id(2) == 0)
    def _():
        o_ref[...] = jnp.zeros_like(o_ref)

    o_ref[...] += jnp.dot(
        x_ref[...], wt_ref[...], preferred_element_type=jnp.float32
    )


@jax.jit
def linear_no_bias(x, w):
    """Pallas TPU kernel for y = x @ w.T  (nn.Linear(bias=False) semantics)."""
    M, K = x.shape
    N, Kw = w.shape
    assert K == Kw, "feature dims must match"

    # One-time transpose outside the kernel: weights are static parameters, so
    # this avoids transposed-RHS layout work inside the K loop and keeps the
    # streamed W tile lane-dense along the output (N) dimension.
    wt = w.T  # (K, N)

    # Tile sizes: multiples of (8, 128); collapse to a single block when the
    # (padded) dimension is small (model sizes: batch ~8, features ~300-1024),
    # otherwise use large lane-dense tiles to amortize per-grid-step overhead.
    # f32 tiles at (256, 512, 512) stay well under the 32 MiB scoped VMEM
    # default even with double buffering, so this is safe on v5e/v6e/v7x.
    tm = min(_round_up(M, 8), 256)
    tn = min(_round_up(N, 128), 512)
    tk = min(_round_up(K, 128), 512)

    Mp = _round_up(M, tm)
    Kp = _round_up(K, tk)
    Np = _round_up(N, tn)

    x_p = x if (Mp, Kp) == (M, K) else jnp.pad(x, ((0, Mp - M), (0, Kp - K)))
    wt_p = wt if (Kp, Np) == (K, N) else jnp.pad(wt, ((0, Kp - K), (0, Np - N)))

    grid = (Mp // tm, Np // tn, Kp // tk)

    out = pl.pallas_call(
        _linear_kernel,
        out_shape=jax.ShapeDtypeStruct((Mp, Np), jnp.float32),
        grid_spec=pltpu.PrefetchScalarGridSpec(
            num_scalar_prefetch=0,
            grid=grid,
            in_specs=[
                pl.BlockSpec((tm, tk), lambda i, j, k: (i, k)),  # x tile
                pl.BlockSpec((tk, tn), lambda i, j, k: (k, j)),  # W.T tile
            ],
            out_specs=pl.BlockSpec((tm, tn), lambda i, j, k: (i, j)),
        ),
        compiler_params=pltpu.CompilerParams(
            dimension_semantics=("parallel", "parallel", "arbitrary"),
        ),
    )(x_p, wt_p)

    if (Mp, Np) != (M, N):
        out = out[:M, :N]
    return out.astype(x.dtype)


class LinearModel:
    """JAX/Pallas port of wbw_translation.models.LinearModel."""

    def __init__(self, shape: int = 300, init="eye"):
        self.shape = shape
        if init == "eye":
            self.Wxy = jnp.eye(shape, dtype=jnp.float32)
            self.Wyx = jnp.eye(shape, dtype=jnp.float32)
        else:
            self.Wxy = jnp.asarray(init[0], dtype=jnp.float32)
            self.Wyx = jnp.asarray(init[1], dtype=jnp.float32)

    def forward(self, x, y):
        return linear_no_bias(x, self.Wxy), linear_no_bias(y, self.Wyx)

    __call__ = forward

    def cycle(self, x, y):
        # Kept as two chained kernels to preserve the exact module semantics.
        # TODO(synk): for static weights the two matmuls can be folded into one
        # (x @ (Wyx @ Wxy).T) to halve launches and HBM round-trips.
        x_cyc = linear_no_bias(linear_no_bias(x, self.Wxy), self.Wyx)
        y_cyc = linear_no_bias(linear_no_bias(y, self.Wyx), self.Wxy)
        return x_cyc, y_cyc


if __name__ == "__main__":
    # Use the module's default feature size (300) to exercise the padding /
    # remainder path that was previously silently wrong.
    batch, shape = 8, 300
    key = jax.random.PRNGKey(0)
    kx, ky, kw1, kw2 = jax.random.split(key, 4)
    x = jax.random.normal(kx, (batch, shape), dtype=jnp.float32)
    y = jax.random.normal(ky, (batch, shape), dtype=jnp.float32)

    # Non-trivial deterministic weights (exercise the 'init=(Wxy, Wyx)' branch).
    Wxy = jax.random.normal(kw1, (shape, shape), dtype=jnp.float32) * 0.05
    Wyx = jax.random.normal(kw2, (shape, shape), dtype=jnp.float32) * 0.05

    model = LinearModel(shape=shape, init=(Wxy, Wyx))
    out_x, out_y = jax.block_until_ready(model(x, y))

    # Reference check against plain JAX (PyTorch semantics: x @ W.T).
    ref_x = x @ Wxy.T
    ref_y = y @ Wyx.T
    assert jnp.allclose(out_x, ref_x, atol=1e-4, rtol=1e-4)
    assert jnp.allclose(out_y, ref_y, atol=1e-4, rtol=1e-4)

    # Also exercise the 'eye' init path and cycle() once (identity round-trip).
    eye_model = LinearModel(shape=shape, init="eye")
    cx, cy = jax.block_until_ready(eye_model.cycle(x, y))
    assert jnp.allclose(cx, x, atol=1e-5) and jnp.allclose(cy, y, atol=1e-5)

    # Larger, tile-spanning shapes to exercise the multi-block grid path.
    big = jax.random.normal(kx, (640, 1024), dtype=jnp.float32)
    Wbig = jax.random.normal(kw1, (1024, 1024), dtype=jnp.float32) * 0.02
    out_big = jax.block_until_ready(linear_no_bias(big, Wbig))
    assert jnp.allclose(out_big, big @ Wbig.T, atol=1e-3, rtol=1e-3)

    print("KERNEL_OK")
</pallas_src>

<mosaic_0001>
module attributes {stable_mosaic.version = 11 : i64} {
  func.func @_linear_kernel(%arg0: i32, %arg1: i32, %arg2: i32, %arg3: memref<8x384xf32, #tpu.memory_space<vmem>>, %arg4: memref<384x384xf32, #tpu.memory_space<vmem>>, %arg5: memref<8x384xf32, #tpu.memory_space<vmem>>) attributes {dimension_semantics = [#tpu.dimension_semantics<parallel>, #tpu.dimension_semantics<parallel>, #tpu.dimension_semantics<arbitrary>], iteration_bounds = array<i64: 1, 1, 1>, scalar_prefetch = 0 : i64, scratch_operands = 0 : i64, tpu.core_type = #tpu.core_type<tc>, window_params = [{transform_indices = @transform_0, window_bounds = array<i64: 8, 384>}, {transform_indices = @transform_1, window_bounds = array<i64: 384, 384>}, {transform_indices = @transform_2, window_bounds = array<i64: 8, 384>}]} {
    %c0_i32 = arith.constant 0 : i32
    %0 = arith.cmpi eq, %arg2, %c0_i32 : i32
    %1 = arith.extui %0 : i1 to i32
    %c0_i32_0 = arith.constant 0 : i32
    %2 = arith.cmpi ne, %1, %c0_i32_0 : i32
    scf.if %2 {
      %cst_8 = arith.constant 0.000000e+00 : f32
      %9 = vector.broadcast %cst_8 : f32 to vector<8x384xf32>
      %c0_9 = arith.constant 0 : index
      %c0_10 = arith.constant 0 : index
      %10 = vector.load %arg5[%c0_9, %c0_10] : memref<8x384xf32, #tpu.memory_space<vmem>>, vector<8x384xf32>
      tpu.vector_store %arg5[%c0_9, %c0_10], %9 {strides = array<i32>} : memref<8x384xf32, #tpu.memory_space<vmem>>, vector<8x384xf32>,
    } else {
    }
    %c0 = arith.constant 0 : index
    %c0_1 = arith.constant 0 : index
    %3 = vector.load %arg5[%c0, %c0_1] : memref<8x384xf32, #tpu.memory_space<vmem>>, vector<8x384xf32>
    %c0_2 = arith.constant 0 : index
    %c0_3 = arith.constant 0 : index
    %4 = vector.load %arg3[%c0_2, %c0_3] : memref<8x384xf32, #tpu.memory_space<vmem>>, vector<8x384xf32>
    %c0_4 = arith.constant 0 : index
    %c0_5 = arith.constant 0 : index
    %5 = vector.load %arg4[%c0_4, %c0_5] : memref<384x384xf32, #tpu.memory_space<vmem>>, vector<384x384xf32>
    %cst = arith.constant dense<0.000000e+00> : vector<8x384xf32>
    %6 = tpu.matmul %4, %5, %cst {dimension_numbers = #tpu.dot_dimension_numbers<[1], [0], [0], [1], [0, 0, 1, 1], [], []>} : vector<8x384xf32>, vector<384x384xf32>, vector<8x384xf32> -> vector<8x384xf32>
    %7 = arith.addf %3, %6 : vector<8x384xf32>
    %c0_6 = arith.constant 0 : index
    %c0_7 = arith.constant 0 : index
    %8 = vector.load %arg5[%c0_6, %c0_7] : memref<8x384xf32, #tpu.memory_space<vmem>>, vector<8x384xf32>
    tpu.vector_store %arg5[%c0_6, %c0_7], %7 {strides = array<i32>} : memref<8x384xf32, #tpu.memory_space<vmem>>, vector<8x384xf32>,
    return
  }
  func.func @transform_0(%arg0: i32, %arg1: i32, %arg2: i32) -> (i32, i32) {
    %c0_i32 = arith.constant 0 : i32
    return %arg0, %arg2 : i32, i32
  }
  func.func @transform_1(%arg0: i32, %arg1: i32, %arg2: i32) -> (i32, i32) {
    %c0_i32 = arith.constant 0 : i32
    return %arg2, %arg1 : i32, i32
  }
  func.func @transform_2(%arg0: i32, %arg1: i32, %arg2: i32) -> (i32, i32) {
    %c0_i32 = arith.constant 0 : i32
    return %arg0, %arg1 : i32, i32
  }
}

</mosaic_0001>

<llo_original>
// kernel: linear_no_bias.1
$region0: #{linear_no_bias.1}
  #allocation0 [shape = 'u32[]', space=smem, size = 0x4, offset = 0x4, fixed_abs, tag = 'smem constant byte address 0x4 - core index']
  #allocation1 [shape = 'u32[144,128]{1,0:T(1,128)}', space=vmem, size = 0x12000, scoped, tag = 'internal scratch']
  %s0 = inlined_call_operand.vmem [shape: f32[8,384], index: 0, kind: input, shape index: {}]
  %s1 = inlined_call_operand.vmem [shape: f32[384,384], index: 1, kind: input, shape index: {}]
  %s2 = inlined_call_operand.hbm [shape: f32[8,384], index: 2, kind: output, shape index: {}]
  %s3 = sld [smem:[#allocation0]]
  $region22: #{linear_no_bias.1} parent=0
    _
  %s5 = ssub.s32 1, %s3
  %s6 = scalar_select 0, %s5, %s3
  $region1: #{linear_no_bias.1} parent=0
    #allocation2 [shape = 'u8[12288]{0}', space=vmem, size = 0x3000, scoped, tag = 'output window, operand 0, single buffered']
    #allocation3 [shape = 's32[1]{0}', space=sflag, size = 0x4, scoped, tag = 'scoped memory for linear_no_bias.1']
    %7 = vsyncpa [#allocation3], 0
    // Predicated region
    $region2: #{linear_no_bias.1} parent=1 // pred_check
      _
    $region3: #{linear_no_bias.1} parent=1 // pred_check_branch
      %9 = sbr.rel (0) target = $region5
    $region4: #{linear_no_bias.1} parent=1 // pred_region
      _
    $region5: #{linear_no_bias.1} parent=1 // pred_fallthru
      _
    // Predicated region
    $region6: #{linear_no_bias.1} parent=1 // pred_check
      _
    $region7: #{linear_no_bias.1} parent=1 // pred_check_branch
      %11 = sbr.rel (0) target = $region9
    $region8: #{linear_no_bias.1} parent=1 // pred_region
      _
    $region9: #{linear_no_bias.1} parent=1 // pred_fallthru
      _
    %p12 = scmp.eq.s32.totalorder 0, 0
    // Predicated region
    $region10: #{linear_no_bias.1} parent=1 // pred_check
      %p13 = pneg %p12
    $region11: #{linear_no_bias.1} parent=1 // pred_check_branch
      %15 = sbr.rel (%p13) target = $region13
    $region12: #{linear_no_bias.1} parent=1 // pred_region
      %16 = vst [vmem:[#allocation2] sm:$0xff] 0.0
      %17 = vst [vmem:[#allocation2 + $0x8] sm:$0xff] 0.0
      %18 = vst [vmem:[#allocation2 + $0x10] sm:$0xff] 0.0
    $region13: #{linear_no_bias.1} parent=1 // pred_fallthru
      _
    %v19 = vld [vmem:[#allocation2] sm:$0xff]
    %v20 = vld [vmem:[#allocation2 + $0x8] sm:$0xff]
    %v21 = vld [vmem:[#allocation2 + $0x10] sm:$0xff]
    %v22 = vld [vmem:[%s0] sm:$0xff]
    %v23 = vld [vmem:[%s0 + $0x8] sm:$0xff]
    %v24 = vld [vmem:[%s0 + $0x10] sm:$0xff]
    %v25 = vld [vmem:[%s1] sm:$0xff]
    %v26 = vld [vmem:[%s1 + $0x8] sm:$0xff]
    %v27 = vld [vmem:[%s1 + $0x10] sm:$0xff]
    %v28 = vld [vmem:[%s1 + $0x18] sm:$0xff]
    %v29 = vld [vmem:[%s1 + $0x20] sm:$0xff]
    %v30 = vld [vmem:[%s1 + $0x28] sm:$0xff]
    %v31 = vld [vmem:[%s1 + $0x30] sm:$0xff]
    %v32 = vld [vmem:[%s1 + $0x38] sm:$0xff]
    %v33 = vld [vmem:[%s1 + $0x40] sm:$0xff]
    %v34 = vld [vmem:[%s1 + $0x48] sm:$0xff]
    %v35 = vld [vmem:[%s1 + $0x50] sm:$0xff]
    %v36 = vld [vmem:[%s1 + $0x58] sm:$0xff]
    %v37 = vld [vmem:[%s1 + $0x60] sm:$0xff]
    %v38 = vld [vmem:[%s1 + $0x68] sm:$0xff]
    %v39 = vld [vmem:[%s1 + $0x70] sm:$0xff]
    %v40 = vld [vmem:[%s1 + $0x78] sm:$0xff]
    %v41 = vld [vmem:[%s1 + $0x80] sm:$0xff]
    %v42 = vld [vmem:[%s1 + $0x88] sm:$0xff]
    %v43 = vld [vmem:[%s1 + $0x90] sm:$0xff]
    %v44 = vld [vmem:[%s1 + $0x98] sm:$0xff]
    %v45 = vld [vmem:[%s1 + $0xa0] sm:$0xff]
    %v46 = vld [vmem:[%s1 + $0xa8] sm:$0xff]
    %v47 = vld [vmem:[%s1 + $0xb0] sm:$0xff]
    %v48 = vld [vmem:[%s1 + $0xb8] sm:$0xff]
    %v49 = vld [vmem:[%s1 + $0xc0] sm:$0xff]
    %v50 = vld [vmem:[%s1 + $0xc8] sm:$0xff]
    %v51 = vld [vmem:[%s1 + $0xd0] sm:$0xff]
    %v52 = vld [vmem:[%s1 + $0xd8] sm:$0xff]
    %v53 = vld [vmem:[%s1 + $0xe0] sm:$0xff]
    %v54 = vld [vmem:[%s1 + $0xe8] sm:$0xff]
    %v55 = vld [vmem:[%s1 + $0xf0] sm:$0xff]
    %v56 = vld [vmem:[%s1 + $0xf8] sm:$0xff]
    %v57 = vld [vmem:[%s1 + $0x100] sm:$0xff]
    %v58 = vld [vmem:[%s1 + $0x108] sm:$0xff]
    %v59 = vld [vmem:[%s1 + $0x110] sm:$0xff]
    %v60 = vld [vmem:[%s1 + $0x118] sm:$0xff]
    %v61 = vld [vmem:[%s1 + $0x120] sm:$0xff]
    %v62 = vld [vmem:[%s1 + $0x128] sm:$0xff]
    %v63 = vld [vmem:[%s1 + $0x130] sm:$0xff]
    %v64 = vld [vmem:[%s1 + $0x138] sm:$0xff]
    %v65 = vld [vmem:[%s1 + $0x140] sm:$0xff]
    %v66 = vld [vmem:[%s1 + $0x148] sm:$0xff]
    %v67 = vld [vmem:[%s1 + $0x150] sm:$0xff]
    %v68 = vld [vmem:[%s1 + $0x158] sm:$0xff]
    %v69 = vld [vmem:[%s1 + $0x160] sm:$0xff]
    %v70 = vld [vmem:[%s1 + $0x168] sm:$0xff]
    %v71 = vld [vmem:[%s1 + $0x170] sm:$0xff]
    %v72 = vld [vmem:[%s1 + $0x178] sm:$0xff]
    %v73 = vld [vmem:[%s1 + $0x180] sm:$0xff]
    %v74 = vld [vmem:[%s1 + $0x188] sm:$0xff]
    %v75 = vld [vmem:[%s1 + $0x190] sm:$0xff]
    %v76 = vld [vmem:[%s1 + $0x198] sm:$0xff]
    %v77 = vld [vmem:[%s1 + $0x1a0] sm:$0xff]
    %v78 = vld [vmem:[%s1 + $0x1a8] sm:$0xff]
    %v79 = vld [vmem:[%s1 + $0x1b0] sm:$0xff]
    %v80 = vld [vmem:[%s1 + $0x1b8] sm:$0xff]
    %v81 = vld [vmem:[%s1 + $0x1c0] sm:$0xff]
    %v82 = vld [vmem:[%s1 + $0x1c8] sm:$0xff]
    %v83 = vld [vmem:[%s1 + $0x1d0] sm:$0xff]
    %v84 = vld [vmem:[%s1 + $0x1d8] sm:$0xff]
    %v85 = vld [vmem:[%s1 + $0x1e0] sm:$0xff]
    %v86 = vld [vmem:[%s1 + $0x1e8] sm:$0xff]
    %v87 = vld [vmem:[%s1 + $0x1f0] sm:$0xff]
    %v88 = vld [vmem:[%s1 + $0x1f8] sm:$0xff]
    %v89 = vld [vmem:[%s1 + $0x200] sm:$0xff]
    %v90 = vld [vmem:[%s1 + $0x208] sm:$0xff]
    %v91 = vld [vmem:[%s1 + $0x210] sm:$0xff]
    %v92 = vld [vmem:[%s1 + $0x218] sm:$0xff]
    %v93 = vld [vmem:[%s1 + $0x220] sm:$0xff]
    %v94 = vld [vmem:[%s1 + $0x228] sm:$0xff]
    %v95 = vld [vmem:[%s1 + $0x230] sm:$0xff]
    %v96 = vld [vmem:[%s1 + $0x238] sm:$0xff]
    %v97 = vld [vmem:[%s1 + $0x240] sm:$0xff]
    %v98 = vld [vmem:[%s1 + $0x248] sm:$0xff]
    %v99 = vld [vmem:[%s1 + $0x250] sm:$0xff]
    %v100 = vld [vmem:[%s1 + $0x258] sm:$0xff]
    %v101 = vld [vmem:[%s1 + $0x260] sm:$0xff]
    %v102 = vld [vmem:[%s1 + $0x268] sm:$0xff]
    %v103 = vld [vmem:[%s1 + $0x270] sm:$0xff]
    %v104 = vld [vmem:[%s1 + $0x278] sm:$0xff]
    %v105 = vld [vmem:[%s1 + $0x280] sm:$0xff]
    %v106 = vld [vmem:[%s1 + $0x288] sm:$0xff]
    %v107 = vld [vmem:[%s1 + $0x290] sm:$0xff]
    %v108 = vld [vmem:[%s1 + $0x298] sm:$0xff]
    %v109 = vld [vmem:[%s1 + $0x2a0] sm:$0xff]
    %v110 = vld [vmem:[%s1 + $0x2a8] sm:$0xff]
    %v111 = vld [vmem:[%s1 + $0x2b0] sm:$0xff]
    %v112 = vld [vmem:[%s1 + $0x2b8] sm:$0xff]
    %v113 = vld [vmem:[%s1 + $0x2c0] sm:$0xff]
    %v114 = vld [vmem:[%s1 + $0x2c8] sm:$0xff]
    %v115 = vld [vmem:[%s1 + $0x2d0] sm:$0xff]
    %v116 = vld [vmem:[%s1 + $0x2d8] sm:$0xff]
    %v117 = vld [vmem:[%s1 + $0x2e0] sm:$0xff]
    %v118 = vld [vmem:[%s1 + $0x2e8] sm:$0xff]
    %v119 = vld [vmem:[%s1 + $0x2f0] sm:$0xff]
    %v120 = vld [vmem:[%s1 + $0x2f8] sm:$0xff]
    %v121 = vld [vmem:[%s1 + $0x300] sm:$0xff]
    %v122 = vld [vmem:[%s1 + $0x308] sm:$0xff]
    %v123 = vld [vmem:[%s1 + $0x310] sm:$0xff]
    %v124 = vld [vmem:[%s1 + $0x318] sm:$0xff]
    %v125 = vld [vmem:[%s1 + $0x320] sm:$0xff]
    %v126 = vld [vmem:[%s1 + $0x328] sm:$0xff]
    %v127 = vld [vmem:[%s1 + $0x330] sm:$0xff]
    %v128 = vld [vmem:[%s1 + $0x338] sm:$0xff]
    %v129 = vld [vmem:[%s1 + $0x340] sm:$0xff]
    %v130 = vld [vmem:[%s1 + $0x348] sm:$0xff]
    %v131 = vld [vmem:[%s1 + $0x350] sm:$0xff]
    %v132 = vld [vmem:[%s1 + $0x358] sm:$0xff]
    %v133 = vld [vmem:[%s1 + $0x360] sm:$0xff]
    %v134 = vld [vmem:[%s1 + $0x368] sm:$0xff]
    %v135 = vld [vmem:[%s1 + $0x370] sm:$0xff]
    %v136 = vld [vmem:[%s1 + $0x378] sm:$0xff]
    %v137 = vld [vmem:[%s1 + $0x380] sm:$0xff]
    %v138 = vld [vmem:[%s1 + $0x388] sm:$0xff]
    %v139 = vld [vmem:[%s1 + $0x390] sm:$0xff]
    %v140 = vld [vmem:[%s1 + $0x398] sm:$0xff]
    %v141 = vld [vmem:[%s1 + $0x3a0] sm:$0xff]
    %v142 = vld [vmem:[%s1 + $0x3a8] sm:$0xff]
    %v143 = vld [vmem:[%s1 + $0x3b0] sm:$0xff]
    %v144 = vld [vmem:[%s1 + $0x3b8] sm:$0xff]
    %v145 = vld [vmem:[%s1 + $0x3c0] sm:$0xff]
    %v146 = vld [vmem:[%s1 + $0x3c8] sm:$0xff]
    %v147 = vld [vmem:[%s1 + $0x3d0] sm:$0xff]
    %v148 = vld [vmem:[%s1 + $0x3d8] sm:$0xff]
    %v149 = vld [vmem:[%s1 + $0x3e0] sm:$0xff]
    %v150 = vld [vmem:[%s1 + $0x3e8] sm:$0xff]
    %v151 = vld [vmem:[%s1 + $0x3f0] sm:$0xff]
    %v152 = vld [vmem:[%s1 + $0x3f8] sm:$0xff]
    %v153 = vld [vmem:[%s1 + $0x400] sm:$0xff]
    %v154 = vld [vmem:[%s1 + $0x408] sm:$0xff]
    %v155 = vld [vmem:[%s1 + $0x410] sm:$0xff]
    %v156 = vld [vmem:[%s1 + $0x418] sm:$0xff]
    %v157 = vld [vmem:[%s1 + $0x420] sm:$0xff]
    %v158 = vld [vmem:[%s1 + $0x428] sm:$0xff]
    %v159 = vld [vmem:[%s1 + $0x430] sm:$0xff]
    %v160 = vld [vmem:[%s1 + $0x438] sm:$0xff]
    %v161 = vld [vmem:[%s1 + $0x440] sm:$0xff]
    %v162 = vld [vmem:[%s1 + $0x448] sm:$0xff]
    %v163 = vld [vmem:[%s1 + $0x450] sm:$0xff]
    %v164 = vld [vmem:[%s1 + $0x458] sm:$0xff]
    %v165 = vld [vmem:[%s1 + $0x460] sm:$0xff]
    %v166 = vld [vmem:[%s1 + $0x468] sm:$0xff]
    %v167 = vld [vmem:[%s1 + $0x470] sm:$0xff]
    %v168 = vld [vmem:[%s1 + $0x478] sm:$0xff]
    %169 = vmatprep.subr.mxu0 %v26
    %170 = vmatpush1.msra.mxu0 %v25
    %171 = vmatprep.subr.mxu0 %v29
    %172 = vmatpush1.msra.mxu0 %v28
    %173 = vmatprep.subr.mxu0 %v32
    %174 = vmatpush1.msra.mxu0 %v31
    %175 = vmatprep.subr.mxu0 %v35
    %176 = vmatpush1.msra.mxu0 %v34
    %177 = vmatprep.subr.mxu0 %v38
    %178 = vmatpush1.msra.mxu0 %v37
    %179 = vmatprep.subr.mxu0 %v41
    %180 = vmatpush1.msra.mxu0 %v40
    %181 = vmatprep.subr.mxu0 %v44
    %182 = vmatpush1.msra.mxu0 %v43
    %183 = vmatprep.subr.mxu0 %v47
    %184 = vmatpush1.msra.mxu0 %v46
    %185 = vmatprep.subr.mxu0 %v50
    %186 = vmatpush1.msra.mxu0 %v49
    %187 = vmatprep.subr.mxu0 %v53
    %188 = vmatpush1.msra.mxu0 %v52
    %189 = vmatprep.subr.mxu0 %v56
    %190 = vmatpush1.msra.mxu0 %v55
    %191 = vmatprep.subr.mxu0 %v59
    %192 = vmatpush1.msra.mxu0 %v58
    %193 = vmatprep.subr.mxu0 %v62
    %194 = vmatpush1.msra.mxu0 %v61
    %195 = vmatprep.subr.mxu0 %v65
    %196 = vmatpush1.msra.mxu0 %v64
    %197 = vmatprep.subr.mxu0 %v68
    %198 = vmatpush1.msra.mxu0 %v67
    %199 = vmatprep.subr.mxu0 %v71
    %200 = vmatpush1.msra.mxu0 %v70
    %201 = vmatprep.subr.mxu0 %v74
    %202 = vmatpush1.msra.mxu0 %v73
    %203 = vmatprep.subr.mxu0 %v77
    %204 = vmatpush1.msra.mxu0 %v76
    %205 = vmatprep.subr.mxu0 %v80
    %206 = vmatpush1.msra.mxu0 %v79
    %207 = vmatprep.subr.mxu0 %v83
    %208 = vmatpush1.msra.mxu0 %v82
    %209 = vmatprep.subr.mxu0 %v86
    %210 = vmatpush1.msra.mxu0 %v85
    %211 = vmatprep.subr.mxu0 %v89
    %212 = vmatpush1.msra.mxu0 %v88
    %213 = vmatprep.subr.mxu0 %v92
    %214 = vmatpush1.msra.mxu0 %v91
    %215 = vmatprep.subr.mxu0 %v95
    %216 = vmatpush1.msra.mxu0 %v94
    %217 = vmatprep.subr.mxu0 %v98
    %218 = vmatpush1.msra.mxu0 %v97
    %219 = vmatprep.subr.mxu0 %v101
    %220 = vmatpush1.msra.mxu0 %v100
    %221 = vmatprep.subr.mxu0 %v104
    %222 = vmatpush1.msra.mxu0 %v103
    %223 = vmatprep.subr.mxu0 %v107
    %224 = vmatpush1.msra.mxu0 %v106
    %225 = vmatprep.subr.mxu0 %v110
    %226 = vmatpush1.msra.mxu0 %v109
    %227 = vmatprep.subr.mxu0 %v113
    %228 = vmatpush1.msra.mxu0 %v112
    %229 = vmatprep.subr.mxu0 %v116
    %230 = vmatpush1.msra.mxu0 %v115
    %231 = vmatprep.subr.mxu0 %v119
    %232 = vmatpush1.msra.mxu0 %v118
    %233 = vmatprep.mubr.f32.mxu0 %v23
    %234 = vmatmul.mubr.f32.gmra.mrb[0].mxu0 %v22
    %v235 = vpop.f32.mrb[0].mxu0
    %v236 = vadd.f32 0.0, %v235
    %v237 = vpop.f32.mrb[0].mxu0
    %v238 = vadd.f32 0.0, %v237
    %239 = vdwg.mxu0
    %240 = vmatprep.subr.mxu0 %v122
    %241 = vmatpush1.msra.mxu0 %v121
    %242 = vmatprep.subr.mxu0 %v125
    %243 = vmatpush1.msra.mxu0 %v124
    %244 = vmatprep.subr.mxu0 %v128
    %245 = vmatpush1.msra.mxu0 %v127
    %246 = vmatprep.subr.mxu0 %v131
    %247 = vmatpush1.msra.mxu0 %v130
    %248 = vmatprep.subr.mxu0 %v134
    %249 = vmatpush1.msra.mxu0 %v133
    %250 = vmatprep.subr.mxu0 %v137
    %251 = vmatpush1.msra.mxu0 %v136
    %252 = vmatprep.subr.mxu0 %v140
    %253 = vmatpush1.msra.mxu0 %v139
    %254 = vmatprep.subr.mxu0 %v143
    %255 = vmatpush1.msra.mxu0 %v142
    %256 = vmatprep.subr.mxu0 %v146
    %257 = vmatpush1.msra.mxu0 %v145
    %258 = vmatprep.subr.mxu0 %v149
    %259 = vmatpush1.msra.mxu0 %v148
    %260 = vmatprep.subr.mxu0 %v152
    %261 = vmatpush1.msra.mxu0 %v151
    %262 = vmatprep.subr.mxu0 %v155
    %263 = vmatpush1.msra.mxu0 %v154
    %264 = vmatprep.subr.mxu0 %v158
    %265 = vmatpush1.msra.mxu0 %v157
    %266 = vmatprep.subr.mxu0 %v161
    %267 = vmatpush1.msra.mxu0 %v160
    %268 = vmatprep.subr.mxu0 %v164
    %269 = vmatpush1.msra.mxu0 %v163
    %270 = vmatprep.subr.mxu0 %v167
    %271 = vmatpush1.msra.mxu0 %v166
    %272 = vmatprep.subr.mxu0 0.0
    %273 = vmatpush1.msra.mxu0 0.0
    %274 = vmatprep.subr.mxu0 0.0
    %275 = vmatpush1.msra.mxu0 0.0
    %276 = vmatprep.subr.mxu0 0.0
    %277 = vmatpush1.msra.mxu0 0.0
    %278 = vmatprep.subr.mxu0 0.0
    %279 = vmatpush1.msra.mxu0 0.0
    %280 = vmatprep.subr.mxu0 0.0
    %281 = vmatpush1.msra.mxu0 0.0
    %282 = vmatprep.subr.mxu0 0.0
    %283 = vmatpush1.msra.mxu0 0.0
    %284 = vmatprep.subr.mxu0 0.0
    %285 = vmatpush1.msra.mxu0 0.0
    %286 = vmatprep.subr.mxu0 0.0
    %287 = vmatpush1.msra.mxu0 0.0
    %288 = vmatprep.subr.mxu0 0.0
    %289 = vmatpush1.msra.mxu0 0.0
    %290 = vmatprep.subr.mxu0 0.0
    %291 = vmatpush1.msra.mxu0 0.0
    %292 = vmatprep.subr.mxu0 0.0
    %293 = vmatpush1.msra.mxu0 0.0
    %294 = vmatprep.subr.mxu0 0.0
    %295 = vmatpush1.msra.mxu0 0.0
    %296 = vmatprep.subr.mxu0 0.0
    %297 = vmatpush1.msra.mxu0 0.0
    %298 = vmatprep.subr.mxu0 0.0
    %299 = vmatpush1.msra.mxu0 0.0
    %300 = vmatprep.subr.mxu0 0.0
    %301 = vmatpush1.msra.mxu0 0.0
    %302 = vmatprep.subr.mxu0 0.0
    %303 = vmatpush1.msra.mxu0 0.0
    %304 = vmatprep.mubr.f32.mxu0 0.0
    %305 = vmatmul.mubr.f32.gmra.mrb[0].mxu0 %v24
    %v306 = vpop.f32.mrb[0].mxu0
    %v307 = vadd.f32 %v236, %v306
    %v308 = vpop.f32.mrb[0].mxu0
    %v309 = vadd.f32 %v238, %v308
    %310 = vdwg.mxu0
    %311 = vmatprep.subr.mxu0 0.0
    %312 = vmatpush1.msra.mxu0 %v27
    %313 = vmatprep.subr.mxu0 0.0
    %314 = vmatpush1.msra.mxu0 %v30
    %315 = vmatprep.subr.mxu0 0.0
    %316 = vmatpush1.msra.mxu0 %v33
    %317 = vmatprep.subr.mxu0 0.0
    %318 = vmatpush1.msra.mxu0 %v36
    %319 = vmatprep.subr.mxu0 0.0
    %320 = vmatpush1.msra.mxu0 %v39
    %321 = vmatprep.subr.mxu0 0.0
    %322 = vmatpush1.msra.mxu0 %v42
    %323 = vmatprep.subr.mxu0 0.0
    %324 = vmatpush1.msra.mxu0 %v45
    %325 = vmatprep.subr.mxu0 0.0
    %326 = vmatpush1.msra.mxu0 %v48
    %327 = vmatprep.subr.mxu0 0.0
    %328 = vmatpush1.msra.mxu0 %v51
    %329 = vmatprep.subr.mxu0 0.0
    %330 = vmatpush1.msra.mxu0 %v54
    %331 = vmatprep.subr.mxu0 0.0
    %332 = vmatpush1.msra.mxu0 %v57
    %333 = vmatprep.subr.mxu0 0.0
    %334 = vmatpush1.msra.mxu0 %v60
    %335 = vmatprep.subr.mxu0 0.0
    %336 = vmatpush1.msra.mxu0 %v63
    %337 = vmatprep.subr.mxu0 0.0
    %338 = vmatpush1.msra.mxu0 %v66
    %339 = vmatprep.subr.mxu0 0.0
    %340 = vmatpush1.msra.mxu0 %v69
    %341 = vmatprep.subr.mxu0 0.0
    %342 = vmatpush1.msra.mxu0 %v72
    %343 = vmatprep.subr.mxu0 0.0
    %344 = vmatpush1.msra.mxu0 %v75
    %345 = vmatprep.subr.mxu0 0.0
    %346 = vmatpush1.msra.mxu0 %v78
    %347 = vmatprep.subr.mxu0 0.0
    %348 = vmatpush1.msra.mxu0 %v81
    %349 = vmatprep.subr.mxu0 0.0
    %350 = vmatpush1.msra.mxu0 %v84
    %351 = vmatprep.subr.mxu0 0.0
    %352 = vmatpush1.msra.mxu0 %v87
    %353 = vmatprep.subr.mxu0 0.0
    %354 = vmatpush1.msra.mxu0 %v90
    %355 = vmatprep.subr.mxu0 0.0
    %356 = vmatpush1.msra.mxu0 %v93
    %357 = vmatprep.subr.mxu0 0.0
    %358 = vmatpush1.msra.mxu0 %v96
    %359 = vmatprep.subr.mxu0 0.0
    %360 = vmatpush1.msra.mxu0 %v99
    %361 = vmatprep.subr.mxu0 0.0
    %362 = vmatpush1.msra.mxu0 %v102
    %363 = vmatprep.subr.mxu0 0.0
    %364 = vmatpush1.msra.mxu0 %v105
    %365 = vmatprep.subr.mxu0 0.0
    %366 = vmatpush1.msra.mxu0 %v108
    %367 = vmatprep.subr.mxu0 0.0
    %368 = vmatpush1.msra.mxu0 %v111
    %369 = vmatprep.subr.mxu0 0.0
    %370 = vmatpush1.msra.mxu0 %v114
    %371 = vmatprep.subr.mxu0 0.0
    %372 = vmatpush1.msra.mxu0 %v117
    %373 = vmatprep.subr.mxu0 0.0
    %374 = vmatpush1.msra.mxu0 %v120
    %375 = vmatprep.mubr.f32.mxu0 %v23
    %376 = vmatmul.mubr.f32.gmra.mrb[0].mxu0 %v22
    %v377 = vpop.f32.mrb[0].mxu0
    %v378 = vadd.f32 0.0, %v377
    %v379 = vpop.f32.mrb[0].mxu0
    %380 = vdwg.mxu0
    %381 = vmatprep.subr.mxu0 0.0
    %382 = vmatpush1.msra.mxu0 %v123
    %383 = vmatprep.subr.mxu0 0.0
    %384 = vmatpush1.msra.mxu0 %v126
    %385 = vmatprep.subr.mxu0 0.0
    %386 = vmatpush1.msra.mxu0 %v129
    %387 = vmatprep.subr.mxu0 0.0
    %388 = vmatpush1.msra.mxu0 %v132
    %389 = vmatprep.subr.mxu0 0.0
    %390 = vmatpush1.msra.mxu0 %v135
    %391 = vmatprep.subr.mxu0 0.0
    %392 = vmatpush1.msra.mxu0 %v138
    %393 = vmatprep.subr.mxu0 0.0
    %394 = vmatpush1.msra.mxu0 %v141
    %395 = vmatprep.subr.mxu0 0.0
    %396 = vmatpush1.msra.mxu0 %v144
    %397 = vmatprep.subr.mxu0 0.0
    %398 = vmatpush1.msra.mxu0 %v147
    %399 = vmatprep.subr.mxu0 0.0
    %400 = vmatpush1.msra.mxu0 %v150
    %401 = vmatprep.subr.mxu0 0.0
    %402 = vmatpush1.msra.mxu0 %v153
    %403 = vmatprep.subr.mxu0 0.0
    %404 = vmatpush1.msra.mxu0 %v156
    %405 = vmatprep.subr.mxu0 0.0
    %406 = vmatpush1.msra.mxu0 %v159
    %407 = vmatprep.subr.mxu0 0.0
    %408 = vmatpush1.msra.mxu0 %v162
    %409 = vmatprep.subr.mxu0 0.0
    %410 = vmatpush1.msra.mxu0 %v165
    %411 = vmatprep.subr.mxu0 0.0
    %412 = vmatpush1.msra.mxu0 %v168
    %413 = vmatprep.subr.mxu0 0.0
    %414 = vmatpush1.msra.mxu0 0.0
    %415 = vmatprep.subr.mxu0 0.0
    %416 = vmatpush1.msra.mxu0 0.0
    %417 = vmatprep.subr.mxu0 0.0
    %418 = vmatpush1.msra.mxu0 0.0
    %419 = vmatprep.subr.mxu0 0.0
    %420 = vmatpush1.msra.mxu0 0.0
    %421 = vmatprep.subr.mxu0 0.0
    %422 = vmatpush1.msra.mxu0 0.0
    %423 = vmatprep.subr.mxu0 0.0
    %424 = vmatpush1.msra.mxu0 0.0
    %425 = vmatprep.subr.mxu0 0.0
    %426 = vmatpush1.msra.mxu0 0.0
    %427 = vmatprep.subr.mxu0 0.0
    %428 = vmatpush1.msra.mxu0 0.0
    %429 = vmatprep.subr.mxu0 0.0
    %430 = vmatpush1.msra.mxu0 0.0
    %431 = vmatprep.subr.mxu0 0.0
    %432 = vmatpush1.msra.mxu0 0.0
    %433 = vmatprep.subr.mxu0 0.0
    %434 = vmatpush1.msra.mxu0 0.0
    %435 = vmatprep.subr.mxu0 0.0
    %436 = vmatpush1.msra.mxu0 0.0
    %437 = vmatprep.subr.mxu0 0.0
    %438 = vmatpush1.msra.mxu0 0.0
    %439 = vmatprep.subr.mxu0 0.0
    %440 = vmatpush1.msra.mxu0 0.0
    %441 = vmatprep.subr.mxu0 0.0
    %442 = vmatpush1.msra.mxu0 0.0
    %443 = vmatprep.subr.mxu0 0.0
    %444 = vmatpush1.msra.mxu0 0.0
    %445 = vmatprep.mubr.f32.mxu0 0.0
    %446 = vmatmul.mubr.f32.gmra.mrb[0].mxu0 %v24
    %v447 = vpop.f32.mrb[0].mxu0
    %v448 = vadd.f32 %v378, %v447
    %v449 = vpop.f32.mrb[0].mxu0
    %450 = vdwg.mxu0
    %v451 = vadd.f32 %v19, %v307
    %v452 = vadd.f32 %v20, %v309
    %v453 = vadd.f32 %v21, %v448
    %454 = vst [vmem:[#allocation2] sm:$0xff] %v451
    %455 = vst [vmem:[#allocation2 + $0x8] sm:$0xff] %v452
    %456 = vst [vmem:[#allocation2 + $0x10] sm:$0xff] %v453
    // Predicated region
    $region14: #{linear_no_bias.1} parent=1 // pred_check
      _
    $region15: #{linear_no_bias.1} parent=1 // pred_check_branch
      %458 = sbr.rel (0) target = $region17
    $region16: #{linear_no_bias.1} parent=1 // pred_region
      %s460 = ssub.s32 384, 384
      %461 = vsyncadd [#allocation3], %s460
      %s463 = sshll.u32 [#allocation2], 4
      %s464 = int_to_ptr.vmem [resolvable:$true] %s463
      %466 = dma.vmem_to_hbm [thread:$0]  %s464, 384, %s2, [#allocation3]
    $region17: #{linear_no_bias.1} parent=1 // pred_fallthru
      _
    // Predicated region
    $region18: #{linear_no_bias.1} parent=1 // pred_check
      _
    $region19: #{linear_no_bias.1} parent=1 // pred_check_branch
      %468 = sbr.rel (0) target = $region21
    $region20: #{linear_no_bias.1} parent=1 // pred_region
      %469 = dma.done [#allocation3], 384
    $region21: #{linear_no_bias.1} parent=1 // pred_fallthru
      _
    %470 = vsyncpa [#allocation3], 1

</llo_original>
